<compile_context>
chip_gen: v6e
topology: v6e:2x2x1
jax: 0.10.0
libtpu: 0.0.40
codegen_flags: <defaults>
</compile_context>

<pallas_src>
import jax
import jax.numpy as jnp
from jax.experimental import pallas as pl
from jax.experimental.pallas import tpu as pltpu


def _round_up(x, m):
    return ((x + m - 1) // m) * m


def _tpu_info():
    try:
        return pltpu.get_tpu_info()
    except Exception:
        return None


def _default_vmem_limit_bytes(info):
    cap = getattr(info, "vmem_capacity_bytes", None) if info is not None else None
    if not cap:
        return 64 << 20  # conservative fallback, safe on every generation
    # ~75% of physical VMEM: ~96 MiB on 128 MiB v5e/v6e, ~48 MiB on 64 MiB v7x.
    return max(32 << 20, (int(cap) * 3) // 4)


def _num_tensorcores(info):
    if info is None:
        return 1
    for name in ("num_tensorcores", "tensorcore_count", "num_cores", "cores_per_chip"):
        n = getattr(info, name, None)
        if isinstance(n, int) and n > 0:
            return n
    return 1  # safe default: no extra grid-splitting (best for single-TC chips)


def _choose_batch_tile(B, D, itemsize, vmem_limit_bytes, num_cores):
    """Largest multiple-of-8 row tile that fits the VMEM budget."""
    # Per-row VMEM: double-buffered HBM in/out tiles (2 * 2 * D * itemsize) plus
    # the in-kernel f32 working set (x0, xl, one live per-layer temp ~ 3*D*4 B).
    per_row = (4 * itemsize + 12) * D
    # ~20% headroom for the (L, D) parameter stacks and compiler temporaries.
    budget = (vmem_limit_bytes * 4) // 5
    bt = budget // max(per_row, 1)
    bt = max(8, min(bt, 2048))
    if num_cores > 1 and B > num_cores * 8:
        # Multi-TC chips only: keep >= 1 grid step per TensorCore so "parallel"
        # semantics can shard the grid, but never drop the tile below 512 rows.
        bt = min(bt, max(512, _round_up(pl.cdiv(B, num_cores), 8)))
    bt = min(bt, _round_up(max(B, 8), 8))
    return _round_up(bt, 8)


def _make_cross_kernel(num_layers, use_mxu):
    def kernel(x_ref, w_ref, b_ref, o_ref):
        x0 = x_ref[...].astype(jnp.float32)        # (bt, D)
        w_all = w_ref[...].astype(jnp.float32)     # (L, D)
        b_all = b_ref[...].astype(jnp.float32)     # (L, D)
        D = x_ref.shape[1]

        xl = x0
        for i in range(num_layers):                # static unroll (L is small)
            w_i = w_all[i, :][None, :]             # (1, D)
            b_i = b_all[i, :][None, :]             # (1, D)
            if use_mxu:
                # v7x option: keep the 2-unit XLU free by doing the reduce +
                # lane-broadcast on the otherwise-idle MXU.
                w_mat = jnp.broadcast_to(w_all[i, :][:, None], (D, D))
                s = jnp.dot(xl, w_mat, preferred_element_type=jnp.float32)  # (bt, D)
            else:
                s = jnp.sum(xl * w_i, axis=-1, keepdims=True)               # (bt, 1)
            # Reassociated so the (b_i + xl) VPU add does not wait on the
            # cross-lane reduce producing s (shorter serial dependency chain).
            xl = x0 * s + (b_i + xl)
        o_ref[...] = xl.astype(o_ref.dtype)

    return kernel


def cross_network(x, weights, biases, *, batch_tile=None, vmem_limit_bytes=None,
                  use_mxu=False):
    """x: (B, D), weights/biases: (L, D). Returns (B, D) in x.dtype."""
    B, D = x.shape
    L = weights.shape[0]

    info = _tpu_info()
    if vmem_limit_bytes is None:
        vmem_limit_bytes = _default_vmem_limit_bytes(info)

    # Lane-dense feature dim: pad to a multiple of 128 so stores are unmasked
    # vst (not vst.msk).  Zero padding is exact: padded lanes of x0/xl/w/b are
    # zero, contribute nothing to <x_l, w_i>, and stay zero through every layer.
    Dp = _round_up(D, 128)
    if Dp != D:
        x = jnp.pad(x, ((0, 0), (0, Dp - D)))
        weights = jnp.pad(weights, ((0, 0), (0, Dp - D)))
        biases = jnp.pad(biases, ((0, 0), (0, Dp - D)))

    itemsize = jnp.dtype(x.dtype).itemsize
    if batch_tile is None:
        batch_tile = _choose_batch_tile(B, Dp, itemsize, vmem_limit_bytes,
                                        _num_tensorcores(info))
    assert batch_tile % 8 == 0, "batch_tile must be a multiple of 8"

    # Ragged batch handled by the grid itself: reads past row B in the last
    # block are undefined but every row is independent, and writes past B are
    # masked — so no host-side pad/slice (extra HBM passes) is needed.
    grid = (pl.cdiv(B, batch_tile),)

    out = pl.pallas_call(
        _make_cross_kernel(L, use_mxu),
        out_shape=jax.ShapeDtypeStruct((B, Dp), x.dtype),
        grid_spec=pltpu.PrefetchScalarGridSpec(
            num_scalar_prefetch=0,
            grid=grid,
            in_specs=[
                pl.BlockSpec((batch_tile, Dp), lambda i: (i, 0)),
                pl.BlockSpec((L, Dp), lambda i: (0, 0)),
                pl.BlockSpec((L, Dp), lambda i: (0, 0)),
            ],
            out_specs=pl.BlockSpec((batch_tile, Dp), lambda i: (i, 0)),
        ),
        compiler_params=pltpu.CompilerParams(
            dimension_semantics=("parallel",),
            vmem_limit_bytes=vmem_limit_bytes,
        ),
    )(x, weights, biases)

    return out[:, :D] if Dp != D else out


def cross_network_ref(x, weights, biases):
    """Pure-JAX reference mirroring the PyTorch code (explicit (B,D,1) matmuls)."""
    x0 = x[:, :, None].astype(jnp.float32)                # (B, D, 1)
    xl = x0
    for i in range(weights.shape[0]):
        w = weights[i][:, None].astype(jnp.float32)       # (D, 1)
        b = biases[i][:, None].astype(jnp.float32)        # (D, 1)
        dot1 = jnp.matmul(x0, jnp.swapaxes(xl, 1, 2))     # (B, D, D)
        dot2 = jnp.matmul(dot1, w)                        # (B, D, 1)
        xl = dot2 + b + xl
    return jnp.squeeze(xl, axis=2).astype(x.dtype)


if __name__ == "__main__":
    key = jax.random.PRNGKey(0)
    kx, kw, kx2, kx3, kw3 = jax.random.split(key, 5)

    # Small shapes consistent with the module: batch=8, input_dim=128, 3 layers.
    B, D, L = 8, 128, 3
    x = jax.random.normal(kx, (B, D), dtype=jnp.float32)

    # Deterministic init matching nn.init.xavier_normal_ on a (D, 1) tensor:
    # std = sqrt(2 / (fan_in + fan_out)) = sqrt(2 / (D + 1)); biases start at 0.
    xavier_std = (2.0 / (D + 1)) ** 0.5
    weights = jax.random.normal(kw, (L, D), dtype=jnp.float32) * xavier_std
    biases = jnp.zeros((L, D), dtype=jnp.float32)

    out = jax.block_until_ready(cross_network(x, weights, biases))
    ref = cross_network_ref(x, weights, biases)
    assert out.shape == (B, D)
    assert jnp.allclose(out, ref, atol=1e-4, rtol=1e-4), "mismatch vs reference"

    # Batch not a multiple of the tile -> ragged last grid block, no host pad/trim.
    B2 = 20
    x2 = jax.random.normal(kx2, (B2, D), dtype=jnp.float32)
    out2 = jax.block_until_ready(cross_network(x2, weights, biases))
    assert out2.shape == (B2, D)
    assert jnp.allclose(out2, cross_network_ref(x2, weights, biases),
                        atol=1e-4, rtol=1e-4), "mismatch vs reference (ragged B)"

    # Multi-step grid with a ragged final block (masked tail writes).
    out2b = jax.block_until_ready(cross_network(x2, weights, biases, batch_tile=8))
    assert jnp.allclose(out2b, cross_network_ref(x2, weights, biases),
                        atol=1e-4, rtol=1e-4), "mismatch vs reference (multi-step)"

    # Optional MXU path (v7x XLU offload) — same math, checked for parity.
    out_mxu = jax.block_until_ready(cross_network(x, weights, biases, use_mxu=True))
    assert jnp.allclose(out_mxu, ref, atol=1e-4, rtol=1e-4), "mismatch vs reference (mxu)"

    # Feature dim not a multiple of 128 -> exercises the lane-dense padding path.
    D3 = 96
    x3 = jax.random.normal(kx3, (B, D3), dtype=jnp.float32)
    w3 = jax.random.normal(kw3, (L, D3), dtype=jnp.float32) * (2.0 / (D3 + 1)) ** 0.5
    b3 = jnp.zeros((L, D3), dtype=jnp.float32)
    out3 = jax.block_until_ready(cross_network(x3, w3, b3))
    assert out3.shape == (B, D3)
    assert jnp.allclose(out3, cross_network_ref(x3, w3, b3),
                        atol=1e-4, rtol=1e-4), "mismatch vs reference (D pad)"

    print("KERNEL_OK")
</pallas_src>

<mosaic_0001>
module attributes {stable_mosaic.version = 11 : i64} {
  func.func @kernel(%arg0: i32, %arg1: memref<8x128xf32, #tpu.memory_space<vmem>>, %arg2: memref<3x128xf32, #tpu.memory_space<vmem>>, %arg3: memref<3x128xf32, #tpu.memory_space<vmem>>, %arg4: memref<8x128xf32, #tpu.memory_space<vmem>>) attributes {dimension_semantics = [#tpu.dimension_semantics<parallel>], iteration_bounds = array<i64: 1>, scalar_prefetch = 0 : i64, scratch_operands = 0 : i64, tpu.core_type = #tpu.core_type<tc>, window_params = [{transform_indices = @transform_0, window_bounds = array<i64: 8, 128>}, {pipeline_mode = #tpu.pipeline_mode<synchronous>, transform_indices = @transform_1, window_bounds = array<i64: 3, 128>}, {pipeline_mode = #tpu.pipeline_mode<synchronous>, transform_indices = @transform_2, window_bounds = array<i64: 3, 128>}, {transform_indices = @transform_3, window_bounds = array<i64: 8, 128>}]} {
    %c0 = arith.constant 0 : index
    %c0_0 = arith.constant 0 : index
    %0 = vector.load %arg1[%c0, %c0_0] : memref<8x128xf32, #tpu.memory_space<vmem>>, vector<8x128xf32>
    %c0_1 = arith.constant 0 : index
    %c0_2 = arith.constant 0 : index
    %1 = vector.load %arg2[%c0_1, %c0_2] : memref<3x128xf32, #tpu.memory_space<vmem>>, vector<3x128xf32>
    %c0_3 = arith.constant 0 : index
    %c0_4 = arith.constant 0 : index
    %2 = vector.load %arg3[%c0_3, %c0_4] : memref<3x128xf32, #tpu.memory_space<vmem>>, vector<3x128xf32>
    %3 = vector.extract_strided_slice %1 {offsets = [0, 0], sizes = [1, 128], strides = [1, 1]} : vector<3x128xf32> to vector<1x128xf32>
    %4 = vector.shape_cast %3 : vector<1x128xf32> to vector<128xf32>
    %5 = vector.shape_cast %4 : vector<128xf32> to vector<1x128xf32>
    %6 = vector.extract_strided_slice %2 {offsets = [0, 0], sizes = [1, 128], strides = [1, 1]} : vector<3x128xf32> to vector<1x128xf32>
    %7 = vector.shape_cast %6 : vector<1x128xf32> to vector<128xf32>
    %8 = vector.shape_cast %7 : vector<128xf32> to vector<1x128xf32>
    %9 = vector.broadcast %5 : vector<1x128xf32> to vector<8x128xf32>
    %10 = arith.mulf %0, %9 : vector<8x128xf32>
    %cst = arith.constant dense<0.000000e+00> : vector<8xf32>
    %11 = vector.multi_reduction <add>, %10, %cst [1] : vector<8x128xf32> to vector<8xf32>
    %12 = vector.shape_cast %11 : vector<8xf32> to vector<8x1xf32>
    %13 = vector.broadcast %12 : vector<8x1xf32> to vector<8x128xf32>
    %14 = arith.mulf %0, %13 : vector<8x128xf32>
    %15 = vector.broadcast %8 : vector<1x128xf32> to vector<8x128xf32>
    %16 = arith.addf %15, %0 : vector<8x128xf32>
    %17 = arith.addf %14, %16 : vector<8x128xf32>
    %18 = vector.extract_strided_slice %1 {offsets = [1, 0], sizes = [1, 128], strides = [1, 1]} : vector<3x128xf32> to vector<1x128xf32>
    %19 = vector.shape_cast %18 : vector<1x128xf32> to vector<128xf32>
    %20 = vector.shape_cast %19 : vector<128xf32> to vector<1x128xf32>
    %21 = vector.extract_strided_slice %2 {offsets = [1, 0], sizes = [1, 128], strides = [1, 1]} : vector<3x128xf32> to vector<1x128xf32>
    %22 = vector.shape_cast %21 : vector<1x128xf32> to vector<128xf32>
    %23 = vector.shape_cast %22 : vector<128xf32> to vector<1x128xf32>
    %24 = vector.broadcast %20 : vector<1x128xf32> to vector<8x128xf32>
    %25 = arith.mulf %17, %24 : vector<8x128xf32>
    %cst_5 = arith.constant dense<0.000000e+00> : vector<8xf32>
    %26 = vector.multi_reduction <add>, %25, %cst_5 [1] : vector<8x128xf32> to vector<8xf32>
    %27 = vector.shape_cast %26 : vector<8xf32> to vector<8x1xf32>
    %28 = vector.broadcast %27 : vector<8x1xf32> to vector<8x128xf32>
    %29 = arith.mulf %0, %28 : vector<8x128xf32>
    %30 = vector.broadcast %23 : vector<1x128xf32> to vector<8x128xf32>
    %31 = arith.addf %30, %17 : vector<8x128xf32>
    %32 = arith.addf %29, %31 : vector<8x128xf32>
    %33 = vector.extract_strided_slice %1 {offsets = [2, 0], sizes = [1, 128], strides = [1, 1]} : vector<3x128xf32> to vector<1x128xf32>
    %34 = vector.shape_cast %33 : vector<1x128xf32> to vector<128xf32>
    %35 = vector.shape_cast %34 : vector<128xf32> to vector<1x128xf32>
    %36 = vector.extract_strided_slice %2 {offsets = [2, 0], sizes = [1, 128], strides = [1, 1]} : vector<3x128xf32> to vector<1x128xf32>
    %37 = vector.shape_cast %36 : vector<1x128xf32> to vector<128xf32>
    %38 = vector.shape_cast %37 : vector<128xf32> to vector<1x128xf32>
    %39 = vector.broadcast %35 : vector<1x128xf32> to vector<8x128xf32>
    %40 = arith.mulf %32, %39 : vector<8x128xf32>
    %cst_6 = arith.constant dense<0.000000e+00> : vector<8xf32>
    %41 = vector.multi_reduction <add>, %40, %cst_6 [1] : vector<8x128xf32> to vector<8xf32>
    %42 = vector.shape_cast %41 : vector<8xf32> to vector<8x1xf32>
    %43 = vector.broadcast %42 : vector<8x1xf32> to vector<8x128xf32>
    %44 = arith.mulf %0, %43 : vector<8x128xf32>
    %45 = vector.broadcast %38 : vector<1x128xf32> to vector<8x128xf32>
    %46 = arith.addf %45, %32 : vector<8x128xf32>
    %47 = arith.addf %44, %46 : vector<8x128xf32>
    %c0_7 = arith.constant 0 : index
    %c0_8 = arith.constant 0 : index
    %48 = vector.load %arg4[%c0_7, %c0_8] : memref<8x128xf32, #tpu.memory_space<vmem>>, vector<8x128xf32>
    tpu.vector_store %arg4[%c0_7, %c0_8], %47 {strides = array<i32>} : memref<8x128xf32, #tpu.memory_space<vmem>>, vector<8x128xf32>,
    return
  }
  func.func @transform_0(%arg0: i32) -> (i32, i32) {
    %c0_i32 = arith.constant 0 : i32
    %c0_i32_0 = arith.constant 0 : i32
    return %arg0, %c0_i32 : i32, i32
  }
  func.func @transform_1(%arg0: i32) -> (i32, i32) {
    %c0_i32 = arith.constant 0 : i32
    %c0_i32_0 = arith.constant 0 : i32
    %c0_i32_1 = arith.constant 0 : i32
    return %c0_i32, %c0_i32_0 : i32, i32
  }
  func.func @transform_2(%arg0: i32) -> (i32, i32) {
    %c0_i32 = arith.constant 0 : i32
    %c0_i32_0 = arith.constant 0 : i32
    %c0_i32_1 = arith.constant 0 : i32
    return %c0_i32, %c0_i32_0 : i32, i32
  }
  func.func @transform_3(%arg0: i32) -> (i32, i32) {
    %c0_i32 = arith.constant 0 : i32
    %c0_i32_0 = arith.constant 0 : i32
    return %arg0, %c0_i32 : i32, i32
  }
}

</mosaic_0001>

<llo_original>
// kernel: tpu_custom_call.1
$region0: #{tpu_custom_call.1}
  #allocation0 [shape = 'u32[]', space=smem, size = 0x4, offset = 0x4, fixed_abs, tag = 'smem constant byte address 0x4 - core index']
  #allocation1 [shape = 'u32[144,128]{1,0:T(1,128)}', space=vmem, size = 0x12000, scoped, tag = 'internal scratch']
  %s0 = inlined_call_operand.hbm [shape: f32[8,128], index: 0, kind: input, shape index: {}]
  %s1 = inlined_call_operand.hbm [shape: f32[3,128], index: 1, kind: input, shape index: {}]
  %s2 = inlined_call_operand.hbm [shape: f32[3,128], index: 2, kind: input, shape index: {}]
  %s3 = inlined_call_operand.hbm [shape: f32[8,128], index: 3, kind: output, shape index: {}]
  %s4 = sld [smem:[#allocation0]]
  $region34: #{tpu_custom_call.1} parent=0
    _
  %s6 = ssub.s32 1, %s4
  %s7 = scalar_select 0, %s6, %s4
  $region1: #{tpu_custom_call.1} parent=0
    #allocation2 [shape = 'u8[4096]{0}', space=vmem, size = 0x1000, scoped, tag = 'input window, operand 0, single buffered']
    #allocation3 [shape = 's32[1]{0}', space=sflag, size = 0x4, scoped, tag = 'scoped memory for tpu_custom_call.1']
    #allocation4 [shape = 's32[1]{0}', space=sflag, size = 0x4, scoped, tag = 'scoped memory for tpu_custom_call.1']
    #allocation5 [shape = 'u8[2048]{0}', space=vmem, size = 0x800, scoped, tag = 'input window, operand 1, single buffered']
    #allocation6 [shape = 's32[1]{0}', space=sflag, size = 0x4, scoped, tag = 'scoped memory for tpu_custom_call.1']
    #allocation7 [shape = 'u8[2048]{0}', space=vmem, size = 0x800, scoped, tag = 'input window, operand 2, single buffered']
    #allocation8 [shape = 'u8[4096]{0}', space=vmem, size = 0x1000, scoped, tag = 'output window, operand 0, single buffered']
    %8 = vsyncpa [#allocation3], 0
    %9 = vsyncpa [#allocation6], 0
    %10 = vsyncpa [#allocation4], 0
    // Predicated region
    $region2: #{tpu_custom_call.1} parent=1 // pred_check
      _
    $region3: #{tpu_custom_call.1} parent=1 // pred_check_branch
      %12 = sbr.rel (0) target = $region5
    $region4: #{tpu_custom_call.1} parent=1 // pred_region
      %s14 = ssub.s32 128, 128
      %15 = vsyncadd [#allocation3], %s14
      %s17 = sshll.u32 [#allocation2], 4
      %s18 = int_to_ptr.vmem [resolvable:$true] %s17
      %20 = dma.hbm_to_vmem [thread:$0]  %s0, 128, %s18, [#allocation3]
    $region5: #{tpu_custom_call.1} parent=1 // pred_fallthru
      _
    // Predicated region
    $region6: #{tpu_custom_call.1} parent=1 // pred_check
      _
    $region7: #{tpu_custom_call.1} parent=1 // pred_check_branch
      %22 = sbr.rel (0) target = $region9
    $region8: #{tpu_custom_call.1} parent=1 // pred_region
      %s24 = ssub.s32 64, 64
      %25 = vsyncadd [#allocation6], %s24
      %s27 = sshll.u32 [#allocation5], 4
      %s28 = int_to_ptr.vmem [resolvable:$true] %s27
      %30 = dma.hbm_to_vmem [thread:$0]  %s1, 64, %s28, [#allocation6]
    $region9: #{tpu_custom_call.1} parent=1 // pred_fallthru
      _
    // Predicated region
    $region10: #{tpu_custom_call.1} parent=1 // pred_check
      _
    $region11: #{tpu_custom_call.1} parent=1 // pred_check_branch
      %32 = sbr.rel (0) target = $region13
    $region12: #{tpu_custom_call.1} parent=1 // pred_region
      %s34 = ssub.s32 64, 64
      %35 = vsyncadd [#allocation6], %s34
      %s37 = sshll.u32 [#allocation7], 4
      %s38 = int_to_ptr.vmem [resolvable:$true] %s37
      %40 = dma.hbm_to_vmem [thread:$0]  %s2, 64, %s38, [#allocation6]
    $region13: #{tpu_custom_call.1} parent=1 // pred_fallthru
      _
    // Predicated region
    $region14: #{tpu_custom_call.1} parent=1 // pred_check
      _
    $region15: #{tpu_custom_call.1} parent=1 // pred_check_branch
      %42 = sbr.rel (0) target = $region17
    $region16: #{tpu_custom_call.1} parent=1 // pred_region
      %43 = dma.done [#allocation3], 128
    $region17: #{tpu_custom_call.1} parent=1 // pred_fallthru
      _
    // Predicated region
    $region18: #{tpu_custom_call.1} parent=1 // pred_check
      _
    $region19: #{tpu_custom_call.1} parent=1 // pred_check_branch
      %45 = sbr.rel (0) target = $region21
    $region20: #{tpu_custom_call.1} parent=1 // pred_region
      %46 = dma.done [#allocation6], 64
    $region21: #{tpu_custom_call.1} parent=1 // pred_fallthru
      _
    // Predicated region
    $region22: #{tpu_custom_call.1} parent=1 // pred_check
      _
    $region23: #{tpu_custom_call.1} parent=1 // pred_check_branch
      %48 = sbr.rel (0) target = $region25
    $region24: #{tpu_custom_call.1} parent=1 // pred_region
      %49 = dma.done [#allocation6], 64
    $region25: #{tpu_custom_call.1} parent=1 // pred_fallthru
      _
    %v50 = vld [vmem:[#allocation2] sm:$0xff]
    %v51 = vld [vmem:[#allocation5] sm:$0x7]
    %v52 = vld [vmem:[#allocation7] sm:$0x7]
    %v53 = vlaneseq
    %v54 = vshrl.u32 %v53, 7
    %v55 = vsub.s32 0, %v54
    %v56 = vrot.slane %v51, %v55
    %v57 = vmul.f32 %v50, %v56
    %58 = vadd.xlane.f32.xlu0 %v57
    %v59 = vpop.xlane.xlu0 %58
    %v60 = vmul.f32 %v50, %v59
    %v61 = vlaneseq
    %v62 = vshrl.u32 %v61, 7
    %v63 = vsub.s32 0, %v62
    %v64 = vrot.slane %v52, %v63
    %v65 = vadd.f32 %v64, %v50
    %v66 = vadd.f32 %v60, %v65
    %v67 = vlaneseq
    %v68 = vshrl.u32 %v67, 7
    %v69 = vsub.s32 1, %v68
    %v70 = vrot.slane %v51, %v69
    %v71 = vmul.f32 %v66, %v70
    %72 = vadd.xlane.f32.xlu0 %v71
    %v73 = vpop.xlane.xlu0 %72
    %v74 = vmul.f32 %v50, %v73
    %v75 = vlaneseq
    %v76 = vshrl.u32 %v75, 7
    %v77 = vsub.s32 1, %v76
    %v78 = vrot.slane %v52, %v77
    %v79 = vadd.f32 %v78, %v66
    %v80 = vadd.f32 %v74, %v79
    %v81 = vlaneseq
    %v82 = vshrl.u32 %v81, 7
    %v83 = vsub.s32 2, %v82
    %v84 = vrot.slane %v51, %v83
    %v85 = vmul.f32 %v80, %v84
    %86 = vadd.xlane.f32.xlu0 %v85
    %v87 = vpop.xlane.xlu0 %86
    %v88 = vmul.f32 %v50, %v87
    %v89 = vlaneseq
    %v90 = vshrl.u32 %v89, 7
    %v91 = vsub.s32 2, %v90
    %v92 = vrot.slane %v52, %v91
    %v93 = vadd.f32 %v92, %v80
    %v94 = vadd.f32 %v88, %v93
    %95 = vst [vmem:[#allocation8] sm:$0xff] %v94
    // Predicated region
    $region26: #{tpu_custom_call.1} parent=1 // pred_check
      _
    $region27: #{tpu_custom_call.1} parent=1 // pred_check_branch
      %97 = sbr.rel (0) target = $region29
    $region28: #{tpu_custom_call.1} parent=1 // pred_region
      %s99 = ssub.s32 128, 128
      %100 = vsyncadd [#allocation4], %s99
      %s102 = sshll.u32 [#allocation8], 4
      %s103 = int_to_ptr.vmem [resolvable:$true] %s102
      %105 = dma.vmem_to_hbm [thread:$0]  %s103, 128, %s3, [#allocation4]
    $region29: #{tpu_custom_call.1} parent=1 // pred_fallthru
      _
    // Predicated region
    $region30: #{tpu_custom_call.1} parent=1 // pred_check
      _
    $region31: #{tpu_custom_call.1} parent=1 // pred_check_branch
      %107 = sbr.rel (0) target = $region33
    $region32: #{tpu_custom_call.1} parent=1 // pred_region
      %108 = dma.done [#allocation4], 128
    $region33: #{tpu_custom_call.1} parent=1 // pred_fallthru
      _
    %109 = vsyncpa [#allocation3], 1
    %110 = vsyncpa [#allocation6], 1
    %111 = vsyncpa [#allocation4], 1

</llo_original>
